<compile_context>
chip_gen: v5e
topology: v5e:2x2
jax: 0.10.0
libtpu: 0.0.40
codegen_flags: <defaults>
</compile_context>

<pallas_src>
import jax
import jax.numpy as jnp
import numpy as np
from jax.experimental import pallas as pl
from jax.experimental.pallas import tpu as pltpu

_LANE = 128      # lane width of a vreg
_SUBLANE = 8     # sublane count of a vreg


def _round_up(v, m):
    return ((v + m - 1) // m) * m


def _cdiv(a, b):
    return -(-a // b)


# --------------------------------- kernel -----------------------------------
def _cooc_kernel(x_col_ref, x_row_ref, y_col_ref, y_row_ref,
                 w1t_ref, b1_ref, w2t_ref, b2_ref,
                 src_out_ref, dst_out_ref):
    Bb, tlx, _ = x_col_ref.shape          # (Bb, tlx, 1)   query tile of src
    _, tly, _ = y_col_ref.shape           # (Bb, tly, 1)   query tile of dst
    Dp = w1t_ref.shape[1]                 # hidden dim padded to 128 (VMEM only)
    D = w2t_ref.shape[1]                  # true feature dim (output width)
    f32 = jnp.float32

    x_col = x_col_ref[...]                # query positions on sublanes
    x_row = x_row_ref[...]                # (Bb, 1, Lsp)  full key seq on lanes
    y_col = y_col_ref[...]
    y_row = y_row_ref[...]                # (Bb, 1, Ldp)

    # --- appearance counts: pairwise equality + lane reduction --------------
    # Every reduction is a lane reduction, so counts land with "position" on
    # sublanes — exactly the layout the MLP lift needs (no runtime relayout).
    cnt_x_self = jnp.sum((x_col == x_row).astype(f32), axis=2, keepdims=True)   # (Bb,tlx,1)
    cnt_x_cross = jnp.sum((x_col == y_row).astype(f32), axis=2, keepdims=True)  # (Bb,tlx,1)
    cnt_y_self = jnp.sum((y_col == y_row).astype(f32), axis=2, keepdims=True)   # (Bb,tly,1)
    cnt_y_cross = jnp.sum((y_col == x_row).astype(f32), axis=2, keepdims=True)  # (Bb,tly,1)

    mask_x = (x_col != 0).astype(f32)     # zero the counts of padding ids
    mask_y = (y_col != 0).astype(f32)

    w1t = w1t_ref[...]                    # (1, Dp)  == W1^T, zero-padded cols
    b1 = b1_ref[...]                      # (1, Dp)  zero-padded
    w2t = w2t_ref[...]                    # (Dp, D)  == W2^T, bf16, zero-padded rows
    two_b2 = b2_ref[...] + b2_ref[...]    # (1, D)

    # --- MLP: Linear(1->D) -> ReLU, summed over the two counts, then one
    #     Linear(D->D) bf16 MXU matmul per direction (whole query tile).
    def lift(cnt):                        # (Bb, t, 1) -> (Bb, t, Dp)
        return jnp.maximum(cnt * w1t + b1, 0.0)

    h_x = lift(cnt_x_self * mask_x) + lift(cnt_x_cross * mask_x)   # (Bb,tlx,Dp)
    h_y = lift(cnt_y_self * mask_y) + lift(cnt_y_cross * mask_y)   # (Bb,tly,Dp)

    mxu_dt = w2t.dtype
    out_x = jnp.dot(h_x.reshape(Bb * tlx, Dp).astype(mxu_dt), w2t,
                    preferred_element_type=f32) + two_b2           # (Bb*tlx, D)
    out_y = jnp.dot(h_y.reshape(Bb * tly, Dp).astype(mxu_dt), w2t,
                    preferred_element_type=f32) + two_b2           # (Bb*tly, D)

    src_out_ref[...] = out_x.reshape(Bb, tlx, D)                   # last dim = D exactly
    dst_out_ref[...] = out_y.reshape(Bb, tly, D)


# ------------------------------- host wrapper -------------------------------
def pack_params(w1, b1, w2, b2, *, mxu_dtype=jnp.bfloat16):
    """Pack/pad the MLP parameters ONCE (hoisted out of the per-forward path)."""
    D = w1.shape[0]
    Dp = _round_up(D, _LANE)
    w1t = jnp.zeros((1, Dp), jnp.float32).at[0, :D].set(
        w1.astype(jnp.float32).reshape(D))
    b1r = jnp.zeros((1, Dp), jnp.float32).at[0, :D].set(b1.astype(jnp.float32))
    w2t = jnp.zeros((Dp, D), mxu_dtype).at[:D, :].set(
        jnp.transpose(w2).astype(mxu_dtype))
    b2r = b2.astype(jnp.float32).reshape(1, D)
    return w1t, b1r, w2t, b2r


def neighbor_cooccurrence_encoder(src_ids, dst_ids, w1t, b1r, w2t, b2r, *,
                                  block_b=None, query_tile=256,
                                  vmem_budget_bytes=14 * 2**20):
    """Module forward: returns (src_features, dst_features), each (B, L, D) f32."""
    B, Ls = src_ids.shape
    B2, Ld = dst_ids.shape
    assert B == B2
    Dp = w1t.shape[1]
    D = w2t.shape[1]

    # --- query-axis tiling: same number of tiles for both sequences ---------
    nt = max(1, _cdiv(max(Ls, Ld), query_tile))
    tlx = _round_up(_cdiv(Ls, nt), _SUBLANE)
    tly = _round_up(_cdiv(Ld, nt), _SUBLANE)
    Lsp = nt * tlx
    Ldp = nt * tly

    # --- batch block size from an explicit per-step VMEM live-set estimate --
    if block_b is None:
        per_b = (4 * (tlx + tly) * (Lsp + Ldp)      # f32 compare tensors
                 + 12 * (tlx + tly) * Dp            # lift intermediates + h
                 + 8 * (tlx + tly) * D              # double-buffered out blocks
                 + 16 * (tlx + tly + Lsp + Ldp))    # double-buffered id blocks
        block_b = max(1, int(vmem_budget_bytes // max(per_b, 1)))
    Bb = max(1, min(block_b, B))
    if nt == 1 and B >= 2:        # guarantee >=2 parallel grid steps (v7x: 2 TCs)
        Bb = min(Bb, _cdiv(B, 2))
    nb = _cdiv(B, Bb)
    Bp = nb * Bb

    # --- glue padding with id 0 (masked in-kernel, sliced off below) --------
    x = src_ids.astype(jnp.int32)
    y = dst_ids.astype(jnp.int32)
    if (Bp, Lsp) != (B, Ls):
        x = jnp.pad(x, ((0, Bp - B), (0, Lsp - Ls)))
    if (Bp, Ldp) != (B, Ld):
        y = jnp.pad(y, ((0, Bp - B), (0, Ldp - Ld)))
    x_col = x.reshape(Bp, Lsp, 1)      # positions on sublanes (query view)
    x_row = x.reshape(Bp, 1, Lsp)      # positions on lanes    (key view)
    y_col = y.reshape(Bp, Ldp, 1)
    y_row = y.reshape(Bp, 1, Ldp)

    # advisory cost estimate for XLA scheduling around this small custom call
    rows = Bp * (Lsp + Ldp)
    flops = int(2 * rows * Dp * D                    # second-layer matmuls
                + 2 * Bp * (Lsp + Ldp) ** 2          # pairwise compares/sums
                + 8 * rows * Dp)                     # lift (mul/add/relu/add)
    bytes_accessed = int(4 * (2 * Bp * (Lsp + Ldp)   # id views (both layouts)
                              + rows * D)            # un-padded outputs
                         + 2 * Dp * D + 12 * Dp)     # weights

    src_p, dst_p = pl.pallas_call(
        _cooc_kernel,
        out_shape=(jax.ShapeDtypeStruct((Bp, Lsp, D), jnp.float32),
                   jax.ShapeDtypeStruct((Bp, Ldp, D), jnp.float32)),
        grid=(nb, nt),
        in_specs=[
            pl.BlockSpec((Bb, tlx, 1), lambda b, q: (b, q, 0)),   # src query tile
            pl.BlockSpec((Bb, 1, Lsp), lambda b, q: (b, 0, 0)),   # src full keys
            pl.BlockSpec((Bb, tly, 1), lambda b, q: (b, q, 0)),   # dst query tile
            pl.BlockSpec((Bb, 1, Ldp), lambda b, q: (b, 0, 0)),   # dst full keys
            pl.BlockSpec((1, Dp), lambda b, q: (0, 0)),           # W1^T
            pl.BlockSpec((1, Dp), lambda b, q: (0, 0)),           # b1
            pl.BlockSpec((Dp, D), lambda b, q: (0, 0)),           # W2^T (bf16)
            pl.BlockSpec((1, D), lambda b, q: (0, 0)),            # b2
        ],
        out_specs=(pl.BlockSpec((Bb, tlx, D), lambda b, q: (b, q, 0)),
                   pl.BlockSpec((Bb, tly, D), lambda b, q: (b, q, 0))),
        compiler_params=pltpu.CompilerParams(
            dimension_semantics=("parallel", "parallel"),
            vmem_limit_bytes=32 * 2**20),
        cost_estimate=pl.CostEstimate(flops=flops, transcendentals=0,
                                      bytes_accessed=bytes_accessed),
    )(x_col, x_row, y_col, y_row, w1t, b1r, w2t, b2r)

    # only the (small) sequence/batch padding is sliced off; feature dim is exact
    src_feat = src_p if (Bp, Lsp) == (B, Ls) else src_p[:B, :Ls, :]
    dst_feat = dst_p if (Bp, Ldp) == (B, Ld) else dst_p[:B, :Ld, :]
    return src_feat, dst_feat


# ----------------------------- pure-numpy reference -------------------------
def _reference(x, y, w1, b1, w2, b2):
    cnt_self = (x[:, :, None] == x[:, None, :]).sum(-1).astype(np.float32)
    cnt_cross = (x[:, :, None] == y[:, None, :]).sum(-1).astype(np.float32)
    app = np.stack([cnt_self, cnt_cross], axis=-1)            # (B, Lx, 2)
    app[x == 0] = 0.0
    a = app[..., None]                                         # (B, Lx, 2, 1)
    h = np.maximum(a @ w1.T + b1, 0.0)                         # (B, Lx, 2, D)
    out = h @ w2.T + b2                                        # (B, Lx, 2, D)
    return out.sum(axis=2)                                     # (B, Lx, D)


if __name__ == "__main__":
    B, Ls, Ld, D = 2, 8, 16, 32
    key = jax.random.PRNGKey(0)
    ks = jax.random.split(key, 6)

    # small id vocabulary so sequences contain repeats and 0 (padding)
    src_ids = jax.random.randint(ks[0], (B, Ls), 0, 6, dtype=jnp.int32)
    dst_ids = jax.random.randint(ks[1], (B, Ld), 0, 6, dtype=jnp.int32)

    # deterministic PyTorch-style Linear init (uniform(-1/sqrt(fan_in), ..))
    w1 = jax.random.uniform(ks[2], (D, 1), jnp.float32, -1.0, 1.0)     # fan_in=1
    b1 = jax.random.uniform(ks[3], (D,), jnp.float32, -1.0, 1.0)
    bound = 1.0 / np.sqrt(D)
    w2 = jax.random.uniform(ks[4], (D, D), jnp.float32, -bound, bound)
    b2 = jax.random.uniform(ks[5], (D,), jnp.float32, -bound, bound)

    # pack/pad the parameters once, jit the forward so the id pads fold
    params = pack_params(w1, b1, w2, b2)
    fwd = jax.jit(lambda s, d: neighbor_cooccurrence_encoder(s, d, *params))

    src_feat, dst_feat = fwd(src_ids, dst_ids)
    jax.block_until_ready((src_feat, dst_feat))

    # correctness check against a pure-numpy (f32) reference of the same math;
    # tolerance accounts for the bf16 MXU path (counts are exact).
    xs, xd = np.asarray(src_ids), np.asarray(dst_ids)
    nw1, nb1, nw2, nb2 = map(np.asarray, (w1, b1, w2, b2))
    ref_src = _reference(xs, xd, nw1, nb1, nw2, nb2)
    ref_dst = _reference(xd, xs, nw1, nb1, nw2, nb2)
    np.testing.assert_allclose(np.asarray(src_feat), ref_src, rtol=2e-2, atol=5e-2)
    np.testing.assert_allclose(np.asarray(dst_feat), ref_dst, rtol=2e-2, atol=5e-2)

    print("KERNEL_OK")
</pallas_src>

<mosaic_0001>
module attributes {stable_mosaic.version = 11 : i64} {
  func.func @_cooc_kernel(%arg0: i32, %arg1: i32, %arg2: memref<1x8x1xi32, #tpu.memory_space<vmem>>, %arg3: memref<1x1x8xi32, #tpu.memory_space<vmem>>, %arg4: memref<1x16x1xi32, #tpu.memory_space<vmem>>, %arg5: memref<1x1x16xi32, #tpu.memory_space<vmem>>, %arg6: memref<1x128xf32, #tpu.memory_space<vmem>>, %arg7: memref<1x128xf32, #tpu.memory_space<vmem>>, %arg8: memref<128x32xbf16, #tpu.memory_space<vmem>>, %arg9: memref<1x32xf32, #tpu.memory_space<vmem>>, %arg10: memref<1x8x32xf32, #tpu.memory_space<vmem>>, %arg11: memref<1x16x32xf32, #tpu.memory_space<vmem>>) attributes {dimension_semantics = [#tpu.dimension_semantics<parallel>, #tpu.dimension_semantics<parallel>], iteration_bounds = array<i64: 2, 1>, scalar_prefetch = 0 : i64, scratch_operands = 0 : i64, tpu.core_type = #tpu.core_type<tc>, window_params = [{transform_indices = @transform_0, window_bounds = array<i64: 1, 8, 1>}, {transform_indices = @transform_1, window_bounds = array<i64: 1, 1, 8>}, {transform_indices = @transform_2, window_bounds = array<i64: 1, 16, 1>}, {transform_indices = @transform_3, window_bounds = array<i64: 1, 1, 16>}, {pipeline_mode = #tpu.pipeline_mode<synchronous>, transform_indices = @transform_4, window_bounds = array<i64: 1, 128>}, {pipeline_mode = #tpu.pipeline_mode<synchronous>, transform_indices = @transform_5, window_bounds = array<i64: 1, 128>}, {pipeline_mode = #tpu.pipeline_mode<synchronous>, transform_indices = @transform_6, window_bounds = array<i64: 128, 32>}, {pipeline_mode = #tpu.pipeline_mode<synchronous>, transform_indices = @transform_7, window_bounds = array<i64: 1, 32>}, {transform_indices = @transform_8, window_bounds = array<i64: 1, 8, 32>}, {transform_indices = @transform_9, window_bounds = array<i64: 1, 16, 32>}]} {
    %c0 = arith.constant 0 : index
    %c0_0 = arith.constant 0 : index
    %c0_1 = arith.constant 0 : index
    %0 = vector.load %arg2[%c0, %c0_0, %c0_1] : memref<1x8x1xi32, #tpu.memory_space<vmem>>, vector<1x8x1xi32>
    %c0_2 = arith.constant 0 : index
    %c0_3 = arith.constant 0 : index
    %c0_4 = arith.constant 0 : index
    %1 = vector.load %arg3[%c0_2, %c0_3, %c0_4] : memref<1x1x8xi32, #tpu.memory_space<vmem>>, vector<1x1x8xi32>
    %c0_5 = arith.constant 0 : index
    %c0_6 = arith.constant 0 : index
    %c0_7 = arith.constant 0 : index
    %2 = vector.load %arg4[%c0_5, %c0_6, %c0_7] : memref<1x16x1xi32, #tpu.memory_space<vmem>>, vector<1x16x1xi32>
    %c0_8 = arith.constant 0 : index
    %c0_9 = arith.constant 0 : index
    %c0_10 = arith.constant 0 : index
    %3 = vector.load %arg5[%c0_8, %c0_9, %c0_10] : memref<1x1x16xi32, #tpu.memory_space<vmem>>, vector<1x1x16xi32>
    %4 = vector.broadcast %0 : vector<1x8x1xi32> to vector<1x8x8xi32>
    %5 = vector.broadcast %1 : vector<1x1x8xi32> to vector<1x8x8xi32>
    %6 = arith.cmpi eq, %4, %5 : vector<1x8x8xi32>
    %7 = arith.extui %6 : vector<1x8x8xi1> to vector<1x8x8xi32>
    %8 = arith.sitofp %7 : vector<1x8x8xi32> to vector<1x8x8xf32>
    %cst = arith.constant dense<0.000000e+00> : vector<1x8xf32>
    %9 = vector.multi_reduction <add>, %8, %cst [2] : vector<1x8x8xf32> to vector<1x8xf32>
    %10 = vector.shape_cast %9 : vector<1x8xf32> to vector<1x8x1xf32>
    %11 = vector.broadcast %0 : vector<1x8x1xi32> to vector<1x8x16xi32>
    %12 = vector.broadcast %3 : vector<1x1x16xi32> to vector<1x8x16xi32>
    %13 = arith.cmpi eq, %11, %12 : vector<1x8x16xi32>
    %14 = arith.extui %13 : vector<1x8x16xi1> to vector<1x8x16xi32>
    %15 = arith.sitofp %14 : vector<1x8x16xi32> to vector<1x8x16xf32>
    %cst_11 = arith.constant dense<0.000000e+00> : vector<1x8xf32>
    %16 = vector.multi_reduction <add>, %15, %cst_11 [2] : vector<1x8x16xf32> to vector<1x8xf32>
    %17 = vector.shape_cast %16 : vector<1x8xf32> to vector<1x8x1xf32>
    %18 = vector.broadcast %2 : vector<1x16x1xi32> to vector<1x16x16xi32>
    %19 = vector.broadcast %3 : vector<1x1x16xi32> to vector<1x16x16xi32>
    %20 = arith.cmpi eq, %18, %19 : vector<1x16x16xi32>
    %21 = arith.extui %20 : vector<1x16x16xi1> to vector<1x16x16xi32>
    %22 = arith.sitofp %21 : vector<1x16x16xi32> to vector<1x16x16xf32>
    %cst_12 = arith.constant dense<0.000000e+00> : vector<1x16xf32>
    %23 = vector.multi_reduction <add>, %22, %cst_12 [2] : vector<1x16x16xf32> to vector<1x16xf32>
    %24 = vector.shape_cast %23 : vector<1x16xf32> to vector<1x16x1xf32>
    %25 = vector.broadcast %2 : vector<1x16x1xi32> to vector<1x16x8xi32>
    %26 = vector.broadcast %1 : vector<1x1x8xi32> to vector<1x16x8xi32>
    %27 = arith.cmpi eq, %25, %26 : vector<1x16x8xi32>
    %28 = arith.extui %27 : vector<1x16x8xi1> to vector<1x16x8xi32>
    %29 = arith.sitofp %28 : vector<1x16x8xi32> to vector<1x16x8xf32>
    %cst_13 = arith.constant dense<0.000000e+00> : vector<1x16xf32>
    %30 = vector.multi_reduction <add>, %29, %cst_13 [2] : vector<1x16x8xf32> to vector<1x16xf32>
    %31 = vector.shape_cast %30 : vector<1x16xf32> to vector<1x16x1xf32>
    %c0_i32 = arith.constant 0 : i32
    %32 = vector.broadcast %c0_i32 : i32 to vector<1x8x1xi32>
    %33 = arith.cmpi ne, %0, %32 : vector<1x8x1xi32>
    %34 = arith.extui %33 : vector<1x8x1xi1> to vector<1x8x1xi32>
    %35 = arith.sitofp %34 : vector<1x8x1xi32> to vector<1x8x1xf32>
    %c0_i32_14 = arith.constant 0 : i32
    %36 = vector.broadcast %c0_i32_14 : i32 to vector<1x16x1xi32>
    %37 = arith.cmpi ne, %2, %36 : vector<1x16x1xi32>
    %38 = arith.extui %37 : vector<1x16x1xi1> to vector<1x16x1xi32>
    %39 = arith.sitofp %38 : vector<1x16x1xi32> to vector<1x16x1xf32>
    %c0_15 = arith.constant 0 : index
    %c0_16 = arith.constant 0 : index
    %40 = vector.load %arg6[%c0_15, %c0_16] : memref<1x128xf32, #tpu.memory_space<vmem>>, vector<1x128xf32>
    %c0_17 = arith.constant 0 : index
    %c0_18 = arith.constant 0 : index
    %41 = vector.load %arg7[%c0_17, %c0_18] : memref<1x128xf32, #tpu.memory_space<vmem>>, vector<1x128xf32>
    %c0_19 = arith.constant 0 : index
    %c0_20 = arith.constant 0 : index
    %42 = vector.load %arg8[%c0_19, %c0_20] : memref<128x32xbf16, #tpu.memory_space<vmem>>, vector<128x32xbf16>
    %c0_21 = arith.constant 0 : index
    %c0_22 = arith.constant 0 : index
    %43 = vector.load %arg9[%c0_21, %c0_22] : memref<1x32xf32, #tpu.memory_space<vmem>>, vector<1x32xf32>
    %c0_23 = arith.constant 0 : index
    %c0_24 = arith.constant 0 : index
    %44 = vector.load %arg9[%c0_23, %c0_24] : memref<1x32xf32, #tpu.memory_space<vmem>>, vector<1x32xf32>
    %45 = arith.addf %43, %44 : vector<1x32xf32>
    %46 = arith.mulf %10, %35 : vector<1x8x1xf32>
    %47 = vector.shape_cast %40 : vector<1x128xf32> to vector<1x1x128xf32>
    %48 = vector.broadcast %46 : vector<1x8x1xf32> to vector<1x8x128xf32>
    %49 = vector.broadcast %47 : vector<1x1x128xf32> to vector<1x8x128xf32>
    %50 = arith.mulf %48, %49 : vector<1x8x128xf32>
    %51 = vector.shape_cast %41 : vector<1x128xf32> to vector<1x1x128xf32>
    %52 = vector.broadcast %51 : vector<1x1x128xf32> to vector<1x8x128xf32>
    %53 = arith.addf %50, %52 : vector<1x8x128xf32>
    %cst_25 = arith.constant 0.000000e+00 : f32
    %54 = vector.broadcast %cst_25 : f32 to vector<1x8x128xf32>
    %55 = arith.maximumf %53, %54 : vector<1x8x128xf32>
    %56 = arith.mulf %17, %35 : vector<1x8x1xf32>
    %57 = vector.shape_cast %40 : vector<1x128xf32> to vector<1x1x128xf32>
    %58 = vector.broadcast %56 : vector<1x8x1xf32> to vector<1x8x128xf32>
    %59 = vector.broadcast %57 : vector<1x1x128xf32> to vector<1x8x128xf32>
    %60 = arith.mulf %58, %59 : vector<1x8x128xf32>
    %61 = vector.shape_cast %41 : vector<1x128xf32> to vector<1x1x128xf32>
    %62 = vector.broadcast %61 : vector<1x1x128xf32> to vector<1x8x128xf32>
    %63 = arith.addf %60, %62 : vector<1x8x128xf32>
    %cst_26 = arith.constant 0.000000e+00 : f32
    %64 = vector.broadcast %cst_26 : f32 to vector<1x8x128xf32>
    %65 = arith.maximumf %63, %64 : vector<1x8x128xf32>
    %66 = arith.addf %55, %65 : vector<1x8x128xf32>
    %67 = arith.mulf %24, %39 : vector<1x16x1xf32>
    %68 = vector.shape_cast %40 : vector<1x128xf32> to vector<1x1x128xf32>
    %69 = vector.broadcast %67 : vector<1x16x1xf32> to vector<1x16x128xf32>
    %70 = vector.broadcast %68 : vector<1x1x128xf32> to vector<1x16x128xf32>
    %71 = arith.mulf %69, %70 : vector<1x16x128xf32>
    %72 = vector.shape_cast %41 : vector<1x128xf32> to vector<1x1x128xf32>
    %73 = vector.broadcast %72 : vector<1x1x128xf32> to vector<1x16x128xf32>
    %74 = arith.addf %71, %73 : vector<1x16x128xf32>
    %cst_27 = arith.constant 0.000000e+00 : f32
    %75 = vector.broadcast %cst_27 : f32 to vector<1x16x128xf32>
    %76 = arith.maximumf %74, %75 : vector<1x16x128xf32>
    %77 = arith.mulf %31, %39 : vector<1x16x1xf32>
    %78 = vector.shape_cast %40 : vector<1x128xf32> to vector<1x1x128xf32>
    %79 = vector.broadcast %77 : vector<1x16x1xf32> to vector<1x16x128xf32>
    %80 = vector.broadcast %78 : vector<1x1x128xf32> to vector<1x16x128xf32>
    %81 = arith.mulf %79, %80 : vector<1x16x128xf32>
    %82 = vector.shape_cast %41 : vector<1x128xf32> to vector<1x1x128xf32>
    %83 = vector.broadcast %82 : vector<1x1x128xf32> to vector<1x16x128xf32>
    %84 = arith.addf %81, %83 : vector<1x16x128xf32>
    %cst_28 = arith.constant 0.000000e+00 : f32
    %85 = vector.broadcast %cst_28 : f32 to vector<1x16x128xf32>
    %86 = arith.maximumf %84, %85 : vector<1x16x128xf32>
    %87 = arith.addf %76, %86 : vector<1x16x128xf32>
    %88 = vector.shape_cast %66 : vector<1x8x128xf32> to vector<8x128xf32>
    %89 = arith.truncf %88 : vector<8x128xf32> to vector<8x128xbf16>
    %cst_29 = arith.constant dense<0.000000e+00> : vector<8x32xf32>
    %90 = tpu.matmul %89, %42, %cst_29 {dimension_numbers = #tpu.dot_dimension_numbers<[1], [0], [0], [1], [0, 0, 1, 1], [], []>} : vector<8x128xbf16>, vector<128x32xbf16>, vector<8x32xf32> -> vector<8x32xf32>
    %91 = vector.broadcast %45 : vector<1x32xf32> to vector<8x32xf32>
    %92 = arith.addf %90, %91 : vector<8x32xf32>
    %93 = vector.shape_cast %87 : vector<1x16x128xf32> to vector<16x128xf32>
    %94 = arith.truncf %93 : vector<16x128xf32> to vector<16x128xbf16>
    %cst_30 = arith.constant dense<0.000000e+00> : vector<16x32xf32>
    %95 = tpu.matmul %94, %42, %cst_30 {dimension_numbers = #tpu.dot_dimension_numbers<[1], [0], [0], [1], [0, 0, 1, 1], [], []>} : vector<16x128xbf16>, vector<128x32xbf16>, vector<16x32xf32> -> vector<16x32xf32>
    %96 = vector.broadcast %45 : vector<1x32xf32> to vector<16x32xf32>
    %97 = arith.addf %95, %96 : vector<16x32xf32>
    %98 = vector.shape_cast %92 : vector<8x32xf32> to vector<1x8x32xf32>
    %c0_31 = arith.constant 0 : index
    %c0_32 = arith.constant 0 : index
    %c0_33 = arith.constant 0 : index
    %99 = vector.load %arg10[%c0_31, %c0_32, %c0_33] : memref<1x8x32xf32, #tpu.memory_space<vmem>>, vector<1x8x32xf32>
    tpu.vector_store %arg10[%c0_31, %c0_32, %c0_33], %98 {strides = array<i32>} : memref<1x8x32xf32, #tpu.memory_space<vmem>>, vector<1x8x32xf32>,
    %100 = vector.shape_cast %97 : vector<16x32xf32> to vector<1x16x32xf32>
    %c0_34 = arith.constant 0 : index
    %c0_35 = arith.constant 0 : index
    %c0_36 = arith.constant 0 : index
    %101 = vector.load %arg11[%c0_34, %c0_35, %c0_36] : memref<1x16x32xf32, #tpu.memory_space<vmem>>, vector<1x16x32xf32>
    tpu.vector_store %arg11[%c0_34, %c0_35, %c0_36], %100 {strides = array<i32>} : memref<1x16x32xf32, #tpu.memory_space<vmem>>, vector<1x16x32xf32>,
    return
  }
  func.func @transform_0(%arg0: i32, %arg1: i32) -> (i32, i32, i32) {
    %c0_i32 = arith.constant 0 : i32
    %c0_i32_0 = arith.constant 0 : i32
    return %arg0, %arg1, %c0_i32 : i32, i32, i32
  }
  func.func @transform_1(%arg0: i32, %arg1: i32) -> (i32, i32, i32) {
    %c0_i32 = arith.constant 0 : i32
    %c0_i32_0 = arith.constant 0 : i32
    %c0_i32_1 = arith.constant 0 : i32
    return %arg0, %c0_i32, %c0_i32_0 : i32, i32, i32
  }
  func.func @transform_2(%arg0: i32, %arg1: i32) -> (i32, i32, i32) {
    %c0_i32 = arith.constant 0 : i32
    %c0_i32_0 = arith.constant 0 : i32
    return %arg0, %arg1, %c0_i32 : i32, i32, i32
  }
  func.func @transform_3(%arg0: i32, %arg1: i32) -> (i32, i32, i32) {
    %c0_i32 = arith.constant 0 : i32
    %c0_i32_0 = arith.constant 0 : i32
    %c0_i32_1 = arith.constant 0 : i32
    return %arg0, %c0_i32, %c0_i32_0 : i32, i32, i32
  }
  func.func @transform_4(%arg0: i32, %arg1: i32) -> (i32, i32) {
    %c0_i32 = arith.constant 0 : i32
    %c0_i32_0 = arith.constant 0 : i32
    %c0_i32_1 = arith.constant 0 : i32
    return %c0_i32, %c0_i32_0 : i32, i32
  }
  func.func @transform_5(%arg0: i32, %arg1: i32) -> (i32, i32) {
    %c0_i32 = arith.constant 0 : i32
    %c0_i32_0 = arith.constant 0 : i32
    %c0_i32_1 = arith.constant 0 : i32
    return %c0_i32, %c0_i32_0 : i32, i32
  }
  func.func @transform_6(%arg0: i32, %arg1: i32) -> (i32, i32) {
    %c0_i32 = arith.constant 0 : i32
    %c0_i32_0 = arith.constant 0 : i32
    %c0_i32_1 = arith.constant 0 : i32
    return %c0_i32, %c0_i32_0 : i32, i32
  }
  func.func @transform_7(%arg0: i32, %arg1: i32) -> (i32, i32) {
    %c0_i32 = arith.constant 0 : i32
    %c0_i32_0 = arith.constant 0 : i32
    %c0_i32_1 = arith.constant 0 : i32
    return %c0_i32, %c0_i32_0 : i32, i32
  }
  func.func @transform_8(%arg0: i32, %arg1: i32) -> (i32, i32, i32) {
    %c0_i32 = arith.constant 0 : i32
    %c0_i32_0 = arith.constant 0 : i32
    return %arg0, %arg1, %c0_i32 : i32, i32, i32
  }
  func.func @transform_9(%arg0: i32, %arg1: i32) -> (i32, i32, i32) {
    %c0_i32 = arith.constant 0 : i32
    %c0_i32_0 = arith.constant 0 : i32
    return %arg0, %arg1, %c0_i32 : i32, i32, i32
  }
}

</mosaic_0001>

<llo_original>
// kernel: _lambda_.1
$region0: #{_lambda_.1}
  #allocation0 [shape = 'u32[]', space=smem, size = 0x4, offset = 0x4, fixed_abs, tag = 'smem constant byte address 0x4 - core index']
  #allocation1 [shape = 'u32[72,128]{1,0:T(1,128)}', space=vmem, size = 0x9000, scoped, tag = 'internal scratch']
  %s0 = inlined_call_operand.vmem [shape: s32[2,8,1], index: 0, kind: input, shape index: {}]
  %s1 = inlined_call_operand.vmem [shape: s32[2,1,8], index: 1, kind: input, shape index: {}]
  %s2 = inlined_call_operand.vmem [shape: s32[2,16,1], index: 2, kind: input, shape index: {}]
  %s3 = inlined_call_operand.vmem [shape: s32[2,1,16], index: 3, kind: input, shape index: {}]
  %s4 = inlined_call_operand.vmem [shape: f32[1,128], index: 4, kind: input, shape index: {}]
  %s5 = inlined_call_operand.vmem [shape: f32[1,128], index: 5, kind: input, shape index: {}]
  %s6 = inlined_call_operand.hbm [shape: bf16[128,32], index: 6, kind: input, shape index: {}]
  %s7 = inlined_call_operand.vmem [shape: f32[1,32], index: 7, kind: input, shape index: {}]
  %s8 = inlined_call_operand.hbm [shape: f32[2,8,32], index: 8, kind: output, shape index: {0}]
  %s9 = inlined_call_operand.hbm [shape: f32[2,16,32], index: 9, kind: output, shape index: {1}]
  %10 = xla_tuple %s8, %s9
  %s11 = sld [smem:[#allocation0]]
  $region77: #{_lambda_.1} parent=0
    _
  %s13 = ssub.s32 1, %s11
  %s14 = scalar_select 0, %s13, %s11
  $region1: #{_lambda_.1} parent=0
    #allocation2 [shape = 'u8[32768]{0}', space=vmem, size = 0x8000, scoped, tag = 'input window, operand 6, single buffered']
    #allocation3 [shape = 's32[2]{0}', space=sflag, size = 0x8, scoped, tag = 'scoped memory for _lambda_.1']
    #allocation4 [shape = 's32[2]{0}', space=sflag, size = 0x8, scoped, tag = 'scoped memory for _lambda_.1']
    #allocation5 [shape = 'u8[8192]{0}', space=vmem, size = 0x2000, scoped, tag = 'output window, operand 0']
    #allocation6 [shape = 'u8[16384]{0}', space=vmem, size = 0x4000, scoped, tag = 'output window, operand 1']
    #allocation7 [shape = 's32[2]{0}', space=sflag, size = 0x8, scoped, tag = 'scoped memory for _lambda_.1']
    %15 = vsyncpa [#allocation3], 0
    %16 = vsyncpa [#allocation4], 0
    %s17 = scalar_lea.sflag [#allocation4], 1
    %18 = vsyncpa %s17, 0
    %19 = vsyncpa [#allocation7], 0
    %s20 = scalar_lea.sflag [#allocation7], 1
    %21 = vsyncpa %s20, 0
    loop: start=0, step=1, limit=4
    $region2: #{_lambda_.1} parent=1 // loop_pre_header
      _
    $region3: #{_lambda_.1} parent=1 // loop_header
      %s23 = sphi 0, %s27
      %p24 = scmp.ge.s32.totalorder %s23, 4
      %s30 = sphi 0, %s42
      %s31 = sphi 0, %s38
      %s32 = sphi 0, %s30
      %s33 = sphi 0, %s31
      %s34 = sphi 0, %s32
      %s35 = sphi 0, %s33
      %s47 = sphi 0, %s49
      %s50 = sphi 0, %s47
      %s51 = sphi 0, %s50
      %s67 = sphi 0, %s51
      %s73 = sphi 0, %s75
      %s76 = sphi 0, %s73
      %s77 = sphi 0, %s76
      %s93 = sphi 0, %s77
      %s101 = sphi 0, %s103
      %s104 = sphi 0, %s101
      %s105 = sphi 0, %s104
      %s121 = sphi 0, %s105
      %s127 = sphi 0, %s129
      %s130 = sphi 0, %s127
      %s131 = sphi 0, %s130
      %s147 = sphi 0, %s131
      %s151 = sphi 0, %s151
      %s153 = sphi 0, %s151
      %s154 = sphi 0, %s153
      %s168 = sphi 0, %s154
      %s172 = sphi 0, %s172
      %s174 = sphi 0, %s172
      %s175 = sphi 0, %s174
      %s189 = sphi 0, %s175
      %s193 = sphi 0, %s193
      %s195 = sphi 0, %s193
      %s196 = sphi 0, %s195
      %s210 = sphi 0, %s196
      %s214 = sphi 0, %s214
      %s216 = sphi 0, %s214
      %s217 = sphi 0, %s216
      %s231 = sphi 0, %s217
      %s239 = sphi 0, %s241
      %s242 = sphi 0, %s239
      %s243 = sphi 0, %s242
      %s259 = sphi 0, %s243
      %s267 = sphi 0, %s269
      %s270 = sphi 0, %s267
      %s271 = sphi 0, %s270
      %s287 = sphi 0, %s271
    $region4: #{_lambda_.1} parent=1 // loop_header_branch
      %26 = sbr.rel (%p24) target = $region8
    $region5: #{_lambda_.1} parent=1 // loop_body
      %s28 = ssub.s32 %s23, 1
      %s29 = ssub.s32 %s23, 2
      %s36 = sadd.s32 1, %s31
      %p37 = scmp.ge.s32.totalorder %s36, 1
      %s38 = scalar_select %p37, 0, %s36
      %s39 = sadd.s32 1, %s30
      %s40 = scalar_select %p37, %s39, %s30
      %p41 = scmp.ge.s32.totalorder %s40, 2
      %s42 = scalar_select %p41, 0, %s40
      %s43 = ssub.s32 %s30, %s42
      %s44 = ssub.s32 %s31, %s38
      %s45 = sor.u32 %s43, %s44
      %p46 = scmp.eq.s32.totalorder %s45, 0
      %s48 = sadd.s32 %s47, 1
      %s49 = scalar_select %p46, %s47, %s48
      %p52 = pneg %p46
      %p53 = scmp.eq.s32.totalorder %s23, 1
      %p54 = por %p52, %p53
      %p55 = scmp.ne.s32.totalorder %s47, %s50
      %p56 = scmp.eq.s32.totalorder %s23, 0
      %p57 = por %p55, %p56
      %p58 = scmp.ne.s32.totalorder %s47, %s50
      %p59 = scmp.eq.s32.totalorder %s28, 1
      %p60 = por %p58, %p59
      %p61 = scmp.ne.s32.totalorder %s50, %s51
      %p62 = scmp.eq.s32.totalorder %s28, 0
      %p63 = por %p61, %p62
      %p64 = scmp.ne.s32.totalorder %s50, %s51
      %p65 = scmp.eq.s32.totalorder %s29, 1
      %p66 = por %p64, %p65
      %p68 = scmp.ne.s32.totalorder %s51, %s67
      %p69 = scmp.eq.s32.totalorder %s29, 0
      %p70 = por %p68, %p69
      %s71 = ssub.s32 %s30, %s42
      %p72 = scmp.eq.s32.totalorder %s71, 0
      %s74 = sadd.s32 %s73, 1
      %s75 = scalar_select %p72, %s73, %s74
      %p78 = pneg %p72
      %p79 = scmp.eq.s32.totalorder %s23, 1
      %p80 = por %p78, %p79
      %p81 = scmp.ne.s32.totalorder %s73, %s76
      %p82 = scmp.eq.s32.totalorder %s23, 0
      %p83 = por %p81, %p82
      %p84 = scmp.ne.s32.totalorder %s73, %s76
      %p85 = scmp.eq.s32.totalorder %s28, 1
      %p86 = por %p84, %p85
      %p87 = scmp.ne.s32.totalorder %s76, %s77
      %p88 = scmp.eq.s32.totalorder %s28, 0
      %p89 = por %p87, %p88
      %p90 = scmp.ne.s32.totalorder %s76, %s77
      %p91 = scmp.eq.s32.totalorder %s29, 1
      %p92 = por %p90, %p91
      %p94 = scmp.ne.s32.totalorder %s77, %s93
      %p95 = scmp.eq.s32.totalorder %s29, 0
      %p96 = por %p94, %p95
      %s97 = ssub.s32 %s30, %s42
      %s98 = ssub.s32 %s31, %s38
      %s99 = sor.u32 %s97, %s98
      %p100 = scmp.eq.s32.totalorder %s99, 0
      %s102 = sadd.s32 %s101, 1
      %s103 = scalar_select %p100, %s101, %s102
      %p106 = pneg %p100
      %p107 = scmp.eq.s32.totalorder %s23, 1
      %p108 = por %p106, %p107
      %p109 = scmp.ne.s32.totalorder %s101, %s104
      %p110 = scmp.eq.s32.totalorder %s23, 0
      %p111 = por %p109, %p110
      %p112 = scmp.ne.s32.totalorder %s101, %s104
      %p113 = scmp.eq.s32.totalorder %s28, 1
      %p114 = por %p112, %p113
      %p115 = scmp.ne.s32.totalorder %s104, %s105
      %p116 = scmp.eq.s32.totalorder %s28, 0
      %p117 = por %p115, %p116
      %p118 = scmp.ne.s32.totalorder %s104, %s105
      %p119 = scmp.eq.s32.totalorder %s29, 1
      %p120 = por %p118, %p119
      %p122 = scmp.ne.s32.totalorder %s105, %s121
      %p123 = scmp.eq.s32.totalorder %s29, 0
      %p124 = por %p122, %p123
      %s125 = ssub.s32 %s30, %s42
      %p126 = scmp.eq.s32.totalorder %s125, 0
      %s128 = sadd.s32 %s127, 1
      %s129 = scalar_select %p126, %s127, %s128
      %p132 = pneg %p126
      %p133 = scmp.eq.s32.totalorder %s23, 1
      %p134 = por %p132, %p133
      %p135 = scmp.ne.s32.totalorder %s127, %s130
      %p136 = scmp.eq.s32.totalorder %s23, 0
      %p137 = por %p135, %p136
      %p138 = scmp.ne.s32.totalorder %s127, %s130
      %p139 = scmp.eq.s32.totalorder %s28, 1
      %p140 = por %p138, %p139
      %p141 = scmp.ne.s32.totalorder %s130, %s131
      %p142 = scmp.eq.s32.totalorder %s28, 0
      %p143 = por %p141, %p142
      %p144 = scmp.ne.s32.totalorder %s130, %s131
      %p145 = scmp.eq.s32.totalorder %s29, 1
      %p146 = por %p144, %p145
      %p148 = scmp.ne.s32.totalorder %s131, %s147
      %p149 = scmp.eq.s32.totalorder %s29, 0
      %p150 = por %p148, %p149
      %s152 = sadd.s32 %s151, 1
      %p155 = scmp.eq.s32.totalorder %s23, 1
      %p156 = scmp.ne.s32.totalorder %s151, %s153
      %p157 = scmp.eq.s32.totalorder %s23, 0
      %p158 = por %p156, %p157
      %p159 = scmp.ne.s32.totalorder %s151, %s153
      %p160 = scmp.eq.s32.totalorder %s28, 1
      %p161 = por %p159, %p160
      %p162 = scmp.ne.s32.totalorder %s153, %s154
      %p163 = scmp.eq.s32.totalorder %s28, 0
      %p164 = por %p162, %p163
      %p165 = scmp.ne.s32.totalorder %s153, %s154
      %p166 = scmp.eq.s32.totalorder %s29, 1
      %p167 = por %p165, %p166
      %p169 = scmp.ne.s32.totalorder %s154, %s168
      %p170 = scmp.eq.s32.totalorder %s29, 0
      %p171 = por %p169, %p170
      %s173 = sadd.s32 %s172, 1
      %p176 = scmp.eq.s32.totalorder %s23, 1
      %p177 = scmp.ne.s32.totalorder %s172, %s174
      %p178 = scmp.eq.s32.totalorder %s23, 0
      %p179 = por %p177, %p178
      %p180 = scmp.ne.s32.totalorder %s172, %s174
      %p181 = scmp.eq.s32.totalorder %s28, 1
      %p182 = por %p180, %p181
      %p183 = scmp.ne.s32.totalorder %s174, %s175
      %p184 = scmp.eq.s32.totalorder %s28, 0
      %p185 = por %p183, %p184
      %p186 = scmp.ne.s32.totalorder %s174, %s175
      %p187 = scmp.eq.s32.totalorder %s29, 1
      %p188 = por %p186, %p187
      %p190 = scmp.ne.s32.totalorder %s175, %s189
      %p191 = scmp.eq.s32.totalorder %s29, 0
      %p192 = por %p190, %p191
      %s194 = sadd.s32 %s193, 1
      %p197 = scmp.eq.s32.totalorder %s23, 1
      %p198 = scmp.ne.s32.totalorder %s193, %s195
      %p199 = scmp.eq.s32.totalorder %s23, 0
      %p200 = por %p198, %p199
      %p201 = scmp.ne.s32.totalorder %s193, %s195
      %p202 = scmp.eq.s32.totalorder %s28, 1
      %p203 = por %p201, %p202
      %p204 = scmp.ne.s32.totalorder %s195, %s196
      %p205 = scmp.eq.s32.totalorder %s28, 0
      %p206 = por %p204, %p205
      %p207 = scmp.ne.s32.totalorder %s195, %s196
      %p208 = scmp.eq.s32.totalorder %s29, 1
      %p209 = por %p207, %p208
      %p211 = scmp.ne.s32.totalorder %s196, %s210
      %p212 = scmp.eq.s32.totalorder %s29, 0
      %p213 = por %p211, %p212
      %s215 = sadd.s32 %s214, 1
      %p218 = scmp.eq.s32.totalorder %s23, 1
      %p219 = scmp.ne.s32.totalorder %s214, %s216
      %p220 = scmp.eq.s32.totalorder %s23, 0
      %p221 = por %p219, %p220
      %p222 = scmp.ne.s32.totalorder %s214, %s216
      %p223 = scmp.eq.s32.totalorder %s28, 1
      %p224 = por %p222, %p223
      %p225 = scmp.ne.s32.totalorder %s216, %s217
      %p226 = scmp.eq.s32.totalorder %s28, 0
      %p227 = por %p225, %p226
      %p228 = scmp.ne.s32.totalorder %s216, %s217
      %p229 = scmp.eq.s32.totalorder %s29, 1
      %p230 = por %p228, %p229
      %p232 = scmp.ne.s32.totalorder %s217, %s231
      %p233 = scmp.eq.s32.totalorder %s29, 0
      %p234 = por %p232, %p233
      %s235 = ssub.s32 %s30, %s42
      %s236 = ssub.s32 %s31, %s38
      %s237 = sor.u32 %s235, %s236
      %p238 = scmp.eq.s32.totalorder %s237, 0
      %s240 = sadd.s32 %s239, 1
      %s241 = scalar_select %p238, %s239, %s240
      %p244 = pneg %p238
      %p245 = scmp.eq.s32.totalorder %s23, 1
      %p246 = por %p244, %p245
      %p247 = scmp.ne.s32.totalorder %s239, %s242
      %p248 = scmp.eq.s32.totalorder %s23, 0
      %p249 = por %p247, %p248
      %p250 = scmp.ne.s32.totalorder %s239, %s242
      %p251 = scmp.eq.s32.totalorder %s28, 1
      %p252 = por %p250, %p251
      %p253 = scmp.ne.s32.totalorder %s242, %s243
      %p254 = scmp.eq.s32.totalorder %s28, 0
      %p255 = por %p253, %p254
      %p256 = scmp.ne.s32.totalorder %s242, %s243
      %p257 = scmp.eq.s32.totalorder %s29, 1
      %p258 = por %p256, %p257
      %p260 = scmp.ne.s32.totalorder %s243, %s259
      %p261 = scmp.eq.s32.totalorder %s29, 0
      %p262 = por %p260, %p261
      %s263 = ssub.s32 %s30, %s42
      %s264 = ssub.s32 %s31, %s38
      %s265 = sor.u32 %s263, %s264
      %p266 = scmp.eq.s32.totalorder %s265, 0
      %s268 = sadd.s32 %s267, 1
      %s269 = scalar_select %p266, %s267, %s268
      %p272 = pneg %p266
      %p273 = scmp.eq.s32.totalorder %s23, 1
      %p274 = por %p272, %p273
      %p275 = scmp.ne.s32.totalorder %s267, %s270
      %p276 = scmp.eq.s32.totalorder %s23, 0
      %p277 = por %p275, %p276
      %p278 = scmp.ne.s32.totalorder %s267, %s270
      %p279 = scmp.eq.s32.totalorder %s28, 1
      %p280 = por %p278, %p279
      %p281 = scmp.ne.s32.totalorder %s270, %s271
      %p282 = scmp.eq.s32.totalorder %s28, 0
      %p283 = por %p281, %p282
      %p284 = scmp.ne.s32.totalorder %s270, %s271
      %p285 = scmp.eq.s32.totalorder %s29, 1
      %p286 = por %p284, %p285
      %p288 = scmp.ne.s32.totalorder %s271, %s287
      %p289 = scmp.eq.s32.totalorder %s29, 0
      %p290 = por %p288, %p289
      %p291 = scmp.le.s32.totalorder 1, %s23
      %p292 = scmp.lt.s32.totalorder %s23, 3
      %p293 = pnand %p291, %p292
      %p294 = pneg %p293
      // Predicated region
      $region9: #{_lambda_.1} parent=5 // pred_check
        _
      $region10: #{_lambda_.1} parent=5 // pred_check_branch
        %296 = sbr.rel (%p293) target = $region12
      $region11: #{_lambda_.1} parent=5 // pred_region
        %s297 = ssub.s32 %s23, 1
        // Predicated region
        $region13: #{_lambda_.1} parent=11 // pred_check
          %p298 = pneg %p164
        $region14: #{_lambda_.1} parent=11 // pred_check_branch
          %300 = sbr.rel (%p298) target = $region16
        $region15: #{_lambda_.1} parent=11 // pred_region
          _
        $region16: #{_lambda_.1} parent=11 // pred_fallthru
          _
        // Predicated region
        $region17: #{_lambda_.1} parent=11 // pred_check
          %p301 = pneg %p185
        $region18: #{_lambda_.1} parent=11 // pred_check_branch
          %303 = sbr.rel (%p301) target = $region20
        $region19: #{_lambda_.1} parent=11 // pred_region
          _
        $region20: #{_lambda_.1} parent=11 // pred_fallthru
          _
        // Predicated region
        $region21: #{_lambda_.1} parent=11 // pred_check
          %p304 = pneg %p206
        $region22: #{_lambda_.1} parent=11 // pred_check_branch
          %306 = sbr.rel (%p304) target = $region24
        $region23: #{_lambda_.1} parent=11 // pred_region
          %308 = vsyncadd [#allocation3], 0
          %s309 = sshll.u32 %s6, 4
          %s310 = int_to_ptr.hbm [resolvable:$true] %s309
          %s311 = sshll.u32 [#allocation2], 4
          %s312 = int_to_ptr.vmem [resolvable:$true] %s311
          %317 = dma.hbm_to_vmem [thread:$0]  %s310, 1024, %s312, [#allocation3], 64, 64, 4
        $region24: #{_lambda_.1} parent=11 // pred_fallthru
          _
        // Predicated region
        $region25: #{_lambda_.1} parent=11 // pred_check
          %p318 = pneg %p227
        $region26: #{_lambda_.1} parent=11 // pred_check_branch
          %320 = sbr.rel (%p318) target = $region28
        $region27: #{_lambda_.1} parent=11 // pred_region
          _
        $region28: #{_lambda_.1} parent=11 // pred_fallthru
          _
      $region12: #{_lambda_.1} parent=5 // pred_fallthru
        _
      %p321 = scmp.lt.s32.totalorder %s23, 2
      // Predicated region
      $region29: #{_lambda_.1} parent=5 // pred_check
        %p322 = pneg %p321
      $region30: #{_lambda_.1} parent=5 // pred_check_branch
        %324 = sbr.rel (%p322) target = $region32
      $region31: #{_lambda_.1} parent=5 // pred_region
        // Predicated region
        $region33: #{_lambda_.1} parent=31 // pred_check
          %p325 = pneg %p57
        $region34: #{_lambda_.1} parent=31 // pred_check_branch
          %327 = sbr.rel (%p325) target = $region36
        $region35: #{_lambda_.1} parent=31 // pred_region
          %p328 = scmp.lt.s32.totalorder %s30, 1
          %s329 = scalar_select %p328, %s30, 1
          %p330 = scmp.lt.s32.totalorder %s31, 0
          %s331 = scalar_select %p330, %s31, 0
          %s332 = sadd.s32 %s331, %s329
          %s333 = smul.addr %s332, 8
          %s334 = scalar_lea.vmem %s0, %s333
        $region36: #{_lambda_.1} parent=31 // pred_fallthru
          _
        // Predicated region
        $region37: #{_lambda_.1} parent=31 // pred_check
          %p335 = pneg %p83
        $region38: #{_lambda_.1} parent=31 // pred_check_branch
          %337 = sbr.rel (%p335) target = $region40
        $region39: #{_lambda_.1} parent=31 // pred_region
          %p338 = scmp.lt.s32.totalorder %s30, 1
          %s339 = scalar_select %p338, %s30, 1
          %s340 = scalar_lea.vmem %s1, %s339
        $region40: #{_lambda_.1} parent=31 // pred_fallthru
          _
        // Predicated region
        $region41: #{_lambda_.1} parent=31 // pred_check
          %p341 = pneg %p111
        $region42: #{_lambda_.1} parent=31 // pred_check_branch
          %343 = sbr.rel (%p341) target = $region44
        $region43: #{_lambda_.1} parent=31 // pred_region
          %s344 = smul.u32 2, %s31
          %p345 = scmp.lt.s32.totalorder %s30, 1
          %s346 = scalar_select %p345, %s30, 1
          %p347 = scmp.lt.s32.totalorder %s344, 1
          %s348 = scalar_select %p347, %s344, 1
          %s349 = smul.addr %s346, 2
          %s350 = sadd.s32 %s348, %s349
          %s351 = smul.addr %s350, 8
          %s352 = scalar_lea.vmem %s2, %s351
          %s353 = smul.u32 2, %s31
        $region44: #{_lambda_.1} parent=31 // pred_fallthru
          _
        // Predicated region
        $region45: #{_lambda_.1} parent=31 // pred_check
          %p354 = pneg %p137
        $region46: #{_lambda_.1} parent=31 // pred_check_branch
          %356 = sbr.rel (%p354) target = $region48
        $region47: #{_lambda_.1} parent=31 // pred_region
          %p357 = scmp.lt.s32.totalorder %s30, 1
          %s358 = scalar_select %p357, %s30, 1
          %s359 = scalar_lea.vmem %s3, %s358
        $region48: #{_lambda_.1} parent=31 // pred_fallthru
          _
      $region32: #{_lambda_.1} parent=5 // pred_fallthru
        _
      %p360 = scmp.le.s32.totalorder 1, %s23
      %p361 = scmp.lt.s32.totalorder %s23, 3
      %p362 = pnand %p360, %p361
      %p363 = pneg %p362
      // Predicated region
      $region49: #{_lambda_.1} parent=5 // pred_check
        _
      $region50: #{_lambda_.1} parent=5 // pred_check_branch
        %365 = sbr.rel (%p362) target = $region52
      $region51: #{_lambda_.1} parent=5 // pred_region
        %s366 = ssub.s32 %s23, 1
        // Predicated region
        $region53: #{_lambda_.1} parent=51 // pred_check
          %p367 = pneg %p206
        $region54: #{_lambda_.1} parent=51 // pred_check_branch
          %369 = sbr.rel (%p367) target = $region56
        $region55: #{_lambda_.1} parent=51 // pred_region
          %371 = dma.done [#allocation3], 1024
        $region56: #{_lambda_.1} parent=51 // pred_fallthru
          _
        %p372 = scmp.lt.s32.totalorder %s32, 1
        %s373 = scalar_select %p372, %s32, 1
        %p374 = scmp.lt.s32.totalorder %s33, 0
        %s375 = scalar_select %p374, %s33, 0
        %s376 = sadd.s32 %s375, %s373
        %s377 = smul.addr %s376, 8
        %s378 = scalar_lea.vmem %s0, %s377
        %p379 = pneg %p63
        %p380 = pneg %p60
        %p381 = scmp.lt.s32.totalorder %s32, 1
        %s382 = scalar_select %p381, %s32, 1
        %s383 = scalar_lea.vmem %s1, %s382
        %p384 = pneg %p89
        %p385 = pneg %p86
        %s386 = smul.u32 2, %s33
        %p387 = scmp.lt.s32.totalorder %s32, 1
        %s388 = scalar_select %p387, %s32, 1
        %p389 = scmp.lt.s32.totalorder %s386, 1
        %s390 = scalar_select %p389, %s386, 1
        %s391 = smul.addr %s388, 2
        %s392 = sadd.s32 %s390, %s391
        %s393 = smul.addr %s392, 8
        %s394 = scalar_lea.vmem %s2, %s393
        %p395 = pneg %p117
        %p396 = pneg %p114
        %p397 = scmp.lt.s32.totalorder %s32, 1
        %s398 = scalar_select %p397, %s32, 1
        %s399 = scalar_lea.vmem %s3, %s398
        %p400 = pneg %p143
        %p401 = pneg %p140
        %p402 = pneg %p164
        %p403 = pneg %p161
        %p404 = pneg %p185
        %p405 = pneg %p182
        %p406 = pneg %p206
        %p407 = pneg %p203
        %p408 = pneg %p227
        %p409 = pneg %p224
        %p410 = pneg %p255
        %p411 = pneg %p252
        %s412 = sand.u32 %s242, 1
        %s413 = scalar_lea.sflag [#allocation4], %s412
        %s414 = sand.u32 %s242, 1
        %s415 = smul.addr %s414, 8
        %s416 = scalar_lea.vmem [#allocation5], %s415
        %p417 = pneg %p283
        %p418 = pneg %p280
        %s419 = sand.u32 %s270, 1
        %s420 = scalar_lea.sflag [#allocation7], %s419
        %s421 = sand.u32 %s270, 1
        %s422 = smul.addr %s421, 16
        %s423 = scalar_lea.vmem [#allocation6], %s422
        %p424 = scmp.lt.s32.totalorder %s32, 1
        %s425 = scalar_select %p424, %s32, 1
        %p426 = scmp.lt.s32.totalorder %s33, 0
        %s427 = scalar_select %p426, %s33, 0
        %s428 = sadd.s32 %s427, %s425
        %s429 = smul.addr %s428, 8
        %s430 = scalar_lea.vmem %s0, %s429
        %p431 = scmp.lt.s32.totalorder %s32, 1
        %s432 = scalar_select %p431, %s32, 1
        %s433 = scalar_lea.vmem %s1, %s432
        %s434 = smul.u32 2, %s33
        %p435 = scmp.lt.s32.totalorder %s32, 1
        %s436 = scalar_select %p435, %s32, 1
        %p437 = scmp.lt.s32.totalorder %s434, 1
        %s438 = scalar_select %p437, %s434, 1
        %s439 = smul.addr %s436, 2
        %s440 = sadd.s32 %s438, %s439
        %s441 = smul.addr %s440, 8
        %s442 = scalar_lea.vmem %s2, %s441
        %s443 = smul.u32 2, %s33
        %p444 = scmp.lt.s32.totalorder %s32, 1
        %s445 = scalar_select %p444, %s32, 1
        %s446 = scalar_lea.vmem %s3, %s445
        %s447 = smul.u32 2, %s33
        %v448 = vld [vmem:[%s430] sm:$0xff]
        %v449 = vld [vmem:[%s433] sm:$0x1]
        %v450 = vld [vmem:[%s442] sm:$0xff]
        %v451 = vld [vmem:[%s442 + $0x8] sm:$0xff]
        %v452 = vld [vmem:[%s446] sm:$0x1]
        %453 = vset.pattern.permute.xlu0 0
        %454 = vperm.xlu0 %453, %v448
        %v455 = vpop.permute.xlu0 %454
        %v456 = vperm.slane %v449, 0
        %vm457 = vcmp.eq.s32.totalorder %v455, %v456
        %v458 = vsel %vm457, 1, 0
        %v459 = vcvt.s32.f32 %v458
        %vm460 = vcmask 64512
        %v461 = vsel %vm460, %v459, 0.0
        %462 = vadd.xlane.f32.xlu0 %v461
        %v463 = vpop.xlane.xlu0 %462
        %v464 = vperm.slane %v452, 0
        %vm465 = vcmp.eq.s32.totalorder %v455, %v464
        %v466 = vsel %vm465, 1, 0
        %v467 = vcvt.s32.f32 %v466
        %vm468 = vcmask 130048
        %v469 = vsel %vm468, %v467, 0.0
        %470 = vadd.xlane.f32.xlu0 %v469
        %v471 = vpop.xlane.xlu0 %470
        %472 = vset.pattern.permute.xlu0 0
        %473 = vperm.xlu0 %472, %v450
        %v474 = vpop.permute.xlu0 %473
        %475 = vset.pattern.permute.xlu0 0
        %476 = vperm.xlu0 %475, %v451
        %v477 = vpop.permute.xlu0 %476
        %vm478 = vcmp.eq.s32.totalorder %v474, %v464
        %vm479 = vcmp.eq.s32.totalorder %v477, %v464
        %v480 = vsel %vm478, 1, 0
        %v481 = vsel %vm479, 1, 0
        %v482 = vcvt.s32.f32 %v480
        %v483 = vcvt.s32.f32 %v481
        %v484 = vsel %vm468, %v482, 0.0
        %485 = vadd.xlane.f32.xlu0 %v484
        %v486 = vpop.xlane.xlu0 %485
        %v487 = vsel %vm468, %v483, 0.0
        %488 = vadd.xlane.f32.xlu0 %v487
        %v489 = vpop.xlane.xlu0 %488
        %vm490 = vcmp.eq.s32.totalorder %v474, %v456
        %vm491 = vcmp.eq.s32.totalorder %v477, %v456
        %v492 = vsel %vm490, 1, 0
        %v493 = vsel %vm491, 1, 0
        %v494 = vcvt.s32.f32 %v492
        %v495 = vcvt.s32.f32 %v493
        %v496 = vsel %vm460, %v494, 0.0
        %497 = vadd.xlane.f32.xlu0 %v496
        %v498 = vpop.xlane.xlu0 %497
        %v499 = vsel %vm460, %v495, 0.0
        %500 = vadd.xlane.f32.xlu0 %v499
        %v501 = vpop.xlane.xlu0 %500
        %vm502 = vcmp.ne.s32.totalorder %v448, 0
        %v503 = vsel %vm502, 1, 0
        %v504 = vcvt.s32.f32 %v503
        %vm505 = vcmp.ne.s32.totalorder %v450, 0
        %vm506 = vcmp.ne.s32.totalorder %v451, 0
        %v507 = vsel %vm505, 1, 0
        %v508 = vsel %vm506, 1, 0
        %v509 = vcvt.s32.f32 %v507
        %v510 = vcvt.s32.f32 %v508
        %v511 = vld [vmem:[%s4] sm:$0x1]
        %v512 = vld [vmem:[%s5] sm:$0x1]
        %v513 = vld [vmem:[#allocation2] sm:$0xf]
        %v514 = vld [vmem:[#allocation2 + $0x4] sm:$0xf]
        %v515 = vld [vmem:[#allocation2 + $0x8] sm:$0xf]
        %v516 = vld [vmem:[#allocation2 + $0xc] sm:$0xf]
        %v517 = vld [vmem:[#allocation2 + $0x10] sm:$0xf]
        %v518 = vld [vmem:[#allocation2 + $0x14] sm:$0xf]
        %v519 = vld [vmem:[#allocation2 + $0x18] sm:$0xf]
        %v520 = vld [vmem:[#allocation2 + $0x1c] sm:$0xf]
        %v521 = vld [vmem:[#allocation2 + $0x20] sm:$0xf]
        %v522 = vld [vmem:[#allocation2 + $0x24] sm:$0xf]
        %v523 = vld [vmem:[#allocation2 + $0x28] sm:$0xf]
        %v524 = vld [vmem:[#allocation2 + $0x2c] sm:$0xf]
        %v525 = vld [vmem:[#allocation2 + $0x30] sm:$0xf]
        %v526 = vld [vmem:[#allocation2 + $0x34] sm:$0xf]
        %v527 = vld [vmem:[#allocation2 + $0x38] sm:$0xf]
        %v528 = vld [vmem:[#allocation2 + $0x3c] sm:$0xf]
        %v529 = vld [vmem:[%s7] sm:$0x1]
        %v530 = vadd.f32 %v529, %v529
        %v531 = vmul.f32 %v463, %v504
        %533 = vset.pattern.permute.xlu0 0
        %534 = vperm.xlu0 %533, %v531
        %v535 = vpop.permute.xlu0 %534
        %v538 = vperm.slane %v511, 0
        %v540 = vmul.f32 %v535, %v538
        %v542 = vperm.slane %v512, 0
        %v544 = vadd.f32 %v540, %v542
        %v545 = vmax.f32 %v544, 0.0
        %v546 = vmul.f32 %v471, %v504
        %548 = vset.pattern.permute.xlu0 0
        %549 = vperm.xlu0 %548, %v546
        %v550 = vpop.permute.xlu0 %549
        %v552 = vmul.f32 %v550, %v538
        %v553 = vadd.f32 %v552, %v542
        %v554 = vmax.f32 %v553, 0.0
        %v555 = vadd.f32 %v545, %v554
        %v556 = vmul.f32 %v486, %v509
        %v557 = vmul.f32 %v489, %v510
        %559 = vset.pattern.permute.xlu0 0
        %560 = vperm.xlu0 %559, %v556
        %v561 = vpop.permute.xlu0 %560
        %564 = vset.pattern.permute.xlu0 0
        %565 = vperm.xlu0 %564, %v557
        %v566 = vpop.permute.xlu0 %565
        %v568 = vmul.f32 %v561, %v538
        %v569 = vmul.f32 %v566, %v538
        %v570 = vadd.f32 %v568, %v542
        %v571 = vadd.f32 %v569, %v542
        %v572 = vmax.f32 %v570, 0.0
        %v573 = vmax.f32 %v571, 0.0
        %v574 = vmul.f32 %v498, %v509
        %v575 = vmul.f32 %v501, %v510
        %577 = vset.pattern.permute.xlu0 0
        %578 = vperm.xlu0 %577, %v574
        %v579 = vpop.permute.xlu0 %578
        %582 = vset.pattern.permute.xlu0 0
        %583 = vperm.xlu0 %582, %v575
        %v584 = vpop.permute.xlu0 %583
        %v586 = vmul.f32 %v579, %v538
        %v587 = vmul.f32 %v584, %v538
        %v588 = vadd.f32 %v586, %v542
        %v589 = vadd.f32 %v587, %v542
        %v590 = vmax.f32 %v588, 0.0
        %v591 = vmax.f32 %v589, 0.0
        %v592 = vadd.f32 %v572, %v590
        %v593 = vadd.f32 %v573, %v591
        %v594 = vpack.c.bf16 %v555, %v555
        %v596 = vperm.slane %v530, 0
        %v614 = vunpack.c.l.b16 %v513
        %v615 = vunpack.c.l.b16 %v514
        %v616 = vunpack.c.l.b16 %v515
        %v617 = vunpack.c.l.b16 %v516
        %v618 = vunpack.c.l.b16 %v517
        %v619 = vunpack.c.l.b16 %v518
        %v620 = vunpack.c.l.b16 %v519
        %v621 = vunpack.c.l.b16 %v520
        %v622 = vunpack.c.l.b16 %v521
        %v623 = vunpack.c.l.b16 %v522
        %v624 = vunpack.c.l.b16 %v523
        %v625 = vunpack.c.l.b16 %v524
        %v626 = vunpack.c.l.b16 %v525
        %v627 = vunpack.c.l.b16 %v526
        %v628 = vunpack.c.l.b16 %v527
        %v629 = vunpack.c.l.b16 %v528
        %v630 = vpack.c.b16 %v615, %v614
        %v631 = vpack.c.b16 %v617, %v616
        %v632 = vpack.c.b16 %v619, %v618
        %v633 = vpack.c.b16 %v621, %v620
        %v634 = vpack.c.b16 %v623, %v622
        %v635 = vpack.c.b16 %v625, %v624
        %v636 = vpack.c.b16 %v627, %v626
        %v637 = vpack.c.b16 %v629, %v628
        %646 = vmatpush.bf16.msra.mxu0 %v637
        %647 = vmatpush.bf16.msra.mxu0 %v636
        %648 = vmatpush.bf16.msra.mxu0 %v635
        %649 = vmatpush.bf16.msra.mxu0 %v634
        %650 = vmatpush.bf16.msra.mxu0 %v633
        %651 = vmatpush.bf16.msra.mxu0 %v632
        %652 = vmatpush.bf16.msra.mxu0 %v631
        %653 = vmatpush.bf16.msra.mxu0 %v630
        %654 = vmatmul.bf16.gmra.mxu0 %v594
        %v655 = vpop.f32.mrf.mxu0
        %v656 = vadd.f32 %v596, %v655
        %v657 = vpop.f32.mrf.mxu0
        %658 = vdwg.mxu0
        %v659 = vpack.c.bf16 %v593, %v592
        %660 = vmatpush.bf16.msra.mxu0 %v637
        %661 = vmatpush.bf16.msra.mxu0 %v636
        %662 = vmatpush.bf16.msra.mxu0 %v635
        %663 = vmatpush.bf16.msra.mxu0 %v634
        %664 = vmatpush.bf16.msra.mxu0 %v633
        %665 = vmatpush.bf16.msra.mxu0 %v632
        %666 = vmatpush.bf16.msra.mxu0 %v631
        %667 = vmatpush.bf16.msra.mxu0 %v630
        %668 = vmatmul.bf16.gmra.mxu0 %v659
        %v669 = vpop.f32.mrf.mxu0
        %v670 = vadd.f32 %v596, %v669
        %v671 = vpop.f32.mrf.mxu0
        %v672 = vadd.f32 %v596, %v671
        %673 = vdwg.mxu0
        %vm674 = vcmask 261120
        %675 = vst.msk [vmem:[%s416] sm:$0xff] %vm674, %v656
        %676 = vst.msk [vmem:[%s423] sm:$0xff] %vm674, %v670
        %677 = vst.msk [vmem:[%s423 + $0x8] sm:$0xff] %vm674, %v672
        %s678 = sand.u32 %s242, 1
        %s679 = scalar_lea.sflag [#allocation4], %s678
        %s680 = sand.u32 %s242, 1
        %s681 = smul.addr %s680, 8
        %s682 = scalar_lea.vmem [#allocation5], %s681
        %s683 = sand.u32 %s270, 1
        %s684 = scalar_lea.sflag [#allocation7], %s683
        %s685 = sand.u32 %s270, 1
        %s686 = smul.addr %s685, 16
        %s687 = scalar_lea.vmem [#allocation6], %s686
        // Predicated region
        $region57: #{_lambda_.1} parent=51 // pred_check
          %p688 = pneg %p252
        $region58: #{_lambda_.1} parent=51 // pred_check_branch
          %690 = sbr.rel (%p688) target = $region60
        $region59: #{_lambda_.1} parent=51 // pred_region
          %692 = vsyncadd %s679, 0
          %s693 = sadd.s32 %s33, %s32
          %s694 = smul.addr %s693, 8
          %s695 = scalar_lea.hbm %s8, %s694
          %s697 = sshll.u32 %s682, 4
          %s698 = int_to_ptr.vmem [resolvable:$true] %s697
          %s699 = sshll.u32 %s695, 4
          %s700 = int_to_ptr.hbm [resolvable:$true] %s699
          %702 = dma.vmem_to_hbm [thread:$0]  %s698, 128, %s700, %s679
        $region60: #{_lambda_.1} parent=51 // pred_fallthru
          _
        // Predicated region
        $region61: #{_lambda_.1} parent=51 // pred_check
          %p703 = pneg %p280
        $region62: #{_lambda_.1} parent=51 // pred_check_branch
          %705 = sbr.rel (%p703) target = $region64
        $region63: #{_lambda_.1} parent=51 // pred_region
          %s706 = smul.u32 2, %s33
          %708 = vsyncadd %s684, 0
          %s709 = smul.addr %s32, 2
          %s710 = sadd.s32 %s706, %s709
          %s711 = smul.addr %s710, 8
          %s712 = scalar_lea.hbm %s9, %s711
          %s713 = sshll.u32 %s687, 4
          %s714 = int_to_ptr.vmem [resolvable:$true] %s713
          %s715 = sshll.u32 %s712, 4
          %s716 = int_to_ptr.hbm [resolvable:$true] %s715
          %721 = dma.vmem_to_hbm [thread:$0]  %s714, 256, %s716, %s684, 128, 128, 8
        $region64: #{_lambda_.1} parent=51 // pred_fallthru
          _
      $region52: #{_lambda_.1} parent=5 // pred_fallthru
        _
      %p722 = scmp.le.s32.totalorder 2, %s23
      // Predicated region
      $region65: #{_lambda_.1} parent=5 // pred_check
        %p723 = pneg %p722
      $region66: #{_lambda_.1} parent=5 // pred_check_branch
        %725 = sbr.rel (%p723) target = $region68
      $region67: #{_lambda_.1} parent=5 // pred_region
        %s726 = ssub.s32 %s23, 2
        // Predicated region
        $region69: #{_lambda_.1} parent=67 // pred_check
          %p727 = pneg %p258
        $region70: #{_lambda_.1} parent=67 // pred_check_branch
          %729 = sbr.rel (%p727) target = $region72
        $region71: #{_lambda_.1} parent=67 // pred_region
          %s730 = sand.u32 %s243, 1
          %s731 = scalar_lea.sflag [#allocation4], %s730
          %s732 = sand.u32 %s243, 1
          %s733 = smul.addr %s732, 8
          %s734 = scalar_lea.vmem [#allocation5], %s733
          %736 = dma.done %s731, 128
        $region72: #{_lambda_.1} parent=67 // pred_fallthru
          _
        // Predicated region
        $region73: #{_lambda_.1} parent=67 // pred_check
          %p737 = pneg %p286
        $region74: #{_lambda_.1} parent=67 // pred_check_branch
          %739 = sbr.rel (%p737) target = $region76
        $region75: #{_lambda_.1} parent=67 // pred_region
          %s740 = sand.u32 %s271, 1
          %s741 = scalar_lea.sflag [#allocation7], %s740
          %s742 = sand.u32 %s271, 1
          %s743 = smul.addr %s742, 16
          %s744 = scalar_lea.vmem [#allocation6], %s743
          %746 = dma.done %s741, 256
        $region76: #{_lambda_.1} parent=67 // pred_fallthru
          _
      $region68: #{_lambda_.1} parent=5 // pred_fallthru
        _
    $region6: #{_lambda_.1} parent=1 // loop_footer
      %s27 = sadd.s32 1, %s23
    $region7: #{_lambda_.1} parent=1 // loop_footer_branch
      %22 = sbr.rel target = $region3
    $region8: #{_lambda_.1} parent=1 // loop_exit
      _
    %747 = vsyncpa [#allocation3], 1
    %s748 = scalar_lea.sflag [#allocation3], 1
    %749 = vsyncpa %s748, 1
    %750 = vsyncpa [#allocation4], 1
    %s751 = scalar_lea.sflag [#allocation4], 1
    %752 = vsyncpa %s751, 1
    %753 = vsyncpa [#allocation7], 1
    %s754 = scalar_lea.sflag [#allocation7], 1
    %755 = vsyncpa %s754, 1

</llo_original>
